<compile_context>
chip_gen: v6e
topology: v6e:2x2x1
jax: 0.10.0
libtpu: 0.0.40
codegen_flags: <defaults>
</compile_context>

<pallas_src>
import functools

import jax
import jax.numpy as jnp
from jax.experimental import pallas as pl
from jax.experimental.pallas import tpu as pltpu


# ---------------------------------------------------------------------------
# Kernels
# ---------------------------------------------------------------------------
def _rmsnorm_kernel(x_ref, w_ref, o_ref, *, eps):
    x = x_ref[...].astype(jnp.float32)
    var = jnp.mean(x * x, axis=-1, keepdims=True)
    inv = jax.lax.rsqrt(var + eps)
    normed = (x * inv).astype(o_ref.dtype)               # cast to input dtype first
    o_ref[...] = w_ref[...].astype(o_ref.dtype) * normed  # (1, H) broadcasts


def _fused_add_rmsnorm_kernel(x_ref, r_ref, w_ref, o_ref, res_ref, *, eps):
    x = x_ref[...].astype(jnp.float32) + r_ref[...].astype(jnp.float32)
    res_ref[...] = x.astype(res_ref.dtype)               # updated residual
    var = jnp.mean(x * x, axis=-1, keepdims=True)
    inv = jax.lax.rsqrt(var + eps)
    normed = (x * inv).astype(o_ref.dtype)
    o_ref[...] = w_ref[...].astype(o_ref.dtype) * normed


# ---------------------------------------------------------------------------
# Tiling helpers
# ---------------------------------------------------------------------------
_MIB = 1024 * 1024


def _cdiv(a: int, b: int) -> int:
    return -(-a // b)


def _round_up(x: int, m: int) -> int:
    return ((x + m - 1) // m) * m


def _vmem_budget_bytes() -> int:
    """~75% of the per-generation VMEM capacity (v7x=64MiB, v5e/v6e=128MiB)."""
    try:
        cap = int(pltpu.get_tpu_info().vmem_capacity_bytes)
    except Exception:  # fall back to the smallest (v7x) budget
        cap = 64 * _MIB
    return min(max(cap * 3 // 4, 32 * _MIB), 96 * _MIB)


def _choose_tile_rows(tokens: int, hidden: int, n_slabs: int, itemsize: int,
                      budget_bytes: int) -> int:
    """Pick the per-step token-tile height.

    Priorities:
      * double-buffered I/O slabs + f32 temporaries fit the VMEM budget,
      * >= ~8 grid steps (4 per TC on a 2-TC v7x) so the BlockSpec pipeline
        actually overlaps DMA-in / compute / DMA-out,
      * blocks stay >= ~256 rows (roofline flattens there) and <= 1024 rows,
      * even block count when > 1 (v7x two-TensorCore balance),
      * row count multiple of 16 (bf16 sublane packing).
    """
    per_row = 2 * n_slabs * hidden * itemsize + 2 * hidden * 4
    tm_vmem = max((min(budget_bytes // max(per_row, 1), 1024) // 16) * 16, 16)

    tokens16 = _round_up(tokens, 16)
    if tokens16 <= min(tm_vmem, 256):
        # Not enough work to split or pipeline: one block.
        return tokens16

    n_min = _cdiv(tokens, tm_vmem)                 # forced by VMEM
    n_cap = max(_cdiv(tokens, 256), n_min)         # keep blocks >= ~256 rows
    n = min(max(n_min, 8), n_cap)
    if n > 1 and (n % 2):                          # even count for v7x 2 TCs
        n += 1
    tm = _round_up(_cdiv(tokens, n), 16)
    return max(min(tm, tm_vmem), 16)


# ---------------------------------------------------------------------------
# Wrapper (the "module")
# ---------------------------------------------------------------------------
class RMSNorm:
    def __init__(self, *, hidden_size: int, eps: float, dtype=jnp.bfloat16,
                 has_weights: bool = True):
        # In the torch module has_weights only controls trainability; the
        # weightless variant still holds (and multiplies by) a ones buffer,
        # so numerics here are identical either way.
        self.has_weights = has_weights
        self.weight = jnp.ones((hidden_size,), dtype=dtype)
        self.variance_epsilon = float(eps)
        self.hidden_size = hidden_size
        self._w2d = self.weight.reshape(1, hidden_size)

    def __call__(self, hidden_states, residual=..., *, donate_inputs: bool = False):
        orig_shape = hidden_states.shape
        H = orig_shape[-1]
        assert H == self.hidden_size
        dtype = hidden_states.dtype
        itemsize = jnp.dtype(dtype).itemsize

        x2d = hidden_states.reshape(-1, H)        # metadata-only reshape
        tokens = x2d.shape[0]
        fused = residual is not ...

        n_slabs = 4 if fused else 2               # (x[, r], out[, res_out])
        vmem_limit = _vmem_budget_bytes()
        tm = _choose_tile_rows(tokens, H, n_slabs, itemsize, vmem_limit)
        grid = (_cdiv(tokens, tm),)               # edge block masked by Pallas

        x_spec = pl.BlockSpec((tm, H), lambda i: (i, 0))
        w_spec = pl.BlockSpec((1, H), lambda i: (0, 0))   # tiny, resident
        out_spec = pl.BlockSpec((tm, H), lambda i: (i, 0))
        cparams = pltpu.CompilerParams(
            dimension_semantics=("parallel",),
            vmem_limit_bytes=int(vmem_limit),
        )

        if not fused:
            # Opt-in in-place: only safe when the caller donates hidden_states.
            io_aliases = {0: 0} if donate_inputs else {}
            out = pl.pallas_call(
                functools.partial(_rmsnorm_kernel, eps=self.variance_epsilon),
                out_shape=jax.ShapeDtypeStruct((tokens, H), dtype),
                grid_spec=pltpu.PrefetchScalarGridSpec(
                    num_scalar_prefetch=0,
                    grid=grid,
                    in_specs=[x_spec, w_spec],
                    out_specs=out_spec,
                ),
                input_output_aliases=io_aliases,
                compiler_params=cparams,
            )(x2d, self._w2d)
            return out.reshape(orig_shape)

        r2d = residual.reshape(-1, H)
        # In-place semantics of the TRT-LLM fused op only when the caller
        # explicitly donates; otherwise aliasing a plain reshape would either
        # clobber the caller's residual buffer or force a defensive copy.
        io_aliases = ({0: 0, 1: 1}
                      if (donate_inputs and r2d.dtype == dtype) else {})
        out, res = pl.pallas_call(
            functools.partial(_fused_add_rmsnorm_kernel,
                              eps=self.variance_epsilon),
            out_shape=(
                jax.ShapeDtypeStruct((tokens, H), dtype),
                jax.ShapeDtypeStruct((tokens, H), dtype),
            ),
            grid_spec=pltpu.PrefetchScalarGridSpec(
                num_scalar_prefetch=0,
                grid=grid,
                in_specs=[x_spec, x_spec, w_spec],
                out_specs=(out_spec, out_spec),
            ),
            input_output_aliases=io_aliases,
            compiler_params=cparams,
        )(x2d, r2d, self._w2d)
        return out.reshape(orig_shape), res.reshape(orig_shape)


# ---------------------------------------------------------------------------
# Pure-JAX reference (mirrors the PyTorch fallback path exactly)
# ---------------------------------------------------------------------------
def _ref_rmsnorm(x, w, eps, residual=None):
    input_dtype = x.dtype
    xf = x.astype(jnp.float32)
    res_out = None
    if residual is not None:
        xf = xf + residual.astype(jnp.float32)
        res_out = xf.astype(input_dtype)
    var = jnp.mean(xf * xf, axis=-1, keepdims=True)
    xf = xf * jax.lax.rsqrt(var + eps)
    out = w.astype(input_dtype) * xf.astype(input_dtype)
    if res_out is None:
        return out
    return out, res_out


def _check_close(a, b):
    assert a.shape == b.shape and a.dtype == b.dtype
    assert jnp.allclose(a.astype(jnp.float32), b.astype(jnp.float32),
                        atol=2e-2, rtol=2e-2)


# ---------------------------------------------------------------------------
if __name__ == "__main__":
    key = jax.random.PRNGKey(0)
    eps = 1e-6
    dtype = jnp.bfloat16
    hidden = 128

    k1, k2, k3, k4, k5, k6 = jax.random.split(key, 6)
    norm = RMSNorm(hidden_size=hidden, eps=eps, dtype=dtype)

    # --- Case A: token count a multiple of 16 (batch=2, seq=8, hidden=128) ---
    x = jax.random.normal(k1, (2, 8, hidden), dtype=jnp.float32).astype(dtype)
    residual = jax.random.normal(k2, (2, 8, hidden), dtype=jnp.float32).astype(dtype)

    out = jax.block_until_ready(norm(x))
    _check_close(out, _ref_rmsnorm(x, norm.weight, eps))

    out2, res2 = norm(x, residual)
    out2 = jax.block_until_ready(out2)
    res2 = jax.block_until_ready(res2)
    ref2, ref_res2 = _ref_rmsnorm(x, norm.weight, eps, residual=residual)
    _check_close(out2, ref2)
    _check_close(res2, ref_res2)

    # --- Case B: ragged token count (15 tokens) -> single masked edge block --
    xr = jax.random.normal(k3, (3, 5, hidden), dtype=jnp.float32).astype(dtype)
    rr = jax.random.normal(k4, (3, 5, hidden), dtype=jnp.float32).astype(dtype)

    outr = jax.block_until_ready(norm(xr))
    _check_close(outr, _ref_rmsnorm(xr, norm.weight, eps))

    outr2, resr2 = norm(xr, rr)
    outr2 = jax.block_until_ready(outr2)
    resr2 = jax.block_until_ready(resr2)
    refr2, ref_resr2 = _ref_rmsnorm(xr, norm.weight, eps, residual=rr)
    _check_close(outr2, refr2)
    _check_close(resr2, ref_resr2)

    # --- Case C: multi-block grid with a ragged final block (600 tokens) -----
    xm = jax.random.normal(k5, (600, hidden), dtype=jnp.float32).astype(dtype)
    rm = jax.random.normal(k6, (600, hidden), dtype=jnp.float32).astype(dtype)

    outm = jax.block_until_ready(norm(xm))
    _check_close(outm, _ref_rmsnorm(xm, norm.weight, eps))

    outm2, resm2 = norm(xm, rm)
    outm2 = jax.block_until_ready(outm2)
    resm2 = jax.block_until_ready(resm2)
    refm2, ref_resm2 = _ref_rmsnorm(xm, norm.weight, eps, residual=rm)
    _check_close(outm2, refm2)
    _check_close(resm2, ref_resm2)

    print("KERNEL_OK")
</pallas_src>

<mosaic_0001>
module attributes {stable_mosaic.version = 11 : i64} {
  func.func @_rmsnorm_kernel(%arg0: i32, %arg1: memref<16x128xbf16, #tpu.memory_space<vmem>>, %arg2: memref<1x128xbf16, #tpu.memory_space<vmem>>, %arg3: memref<16x128xbf16, #tpu.memory_space<vmem>>) attributes {dimension_semantics = [#tpu.dimension_semantics<parallel>], iteration_bounds = array<i64: 1>, scalar_prefetch = 0 : i64, scratch_operands = 0 : i64, tpu.core_type = #tpu.core_type<tc>, window_params = [{transform_indices = @transform_0, window_bounds = array<i64: 16, 128>}, {pipeline_mode = #tpu.pipeline_mode<synchronous>, transform_indices = @transform_1, window_bounds = array<i64: 1, 128>}, {transform_indices = @transform_2, window_bounds = array<i64: 16, 128>}]} {
    %c0 = arith.constant 0 : index
    %c0_0 = arith.constant 0 : index
    %0 = vector.load %arg1[%c0, %c0_0] : memref<16x128xbf16, #tpu.memory_space<vmem>>, vector<16x128xbf16>
    %1 = arith.extf %0 : vector<16x128xbf16> to vector<16x128xf32>
    %2 = arith.mulf %1, %1 : vector<16x128xf32>
    %cst = arith.constant dense<0.000000e+00> : vector<16xf32>
    %3 = vector.multi_reduction <add>, %2, %cst [1] : vector<16x128xf32> to vector<16xf32>
    %4 = vector.shape_cast %3 : vector<16xf32> to vector<16x1xf32>
    %cst_1 = arith.constant 1.280000e+02 : f32
    %5 = vector.broadcast %cst_1 : f32 to vector<16x1xf32>
    %6 = arith.divf %4, %5 : vector<16x1xf32>
    %cst_2 = arith.constant 9.99999997E-7 : f32
    %7 = vector.broadcast %cst_2 : f32 to vector<16x1xf32>
    %8 = arith.addf %6, %7 : vector<16x1xf32>
    %9 = math.rsqrt %8 : vector<16x1xf32>
    %10 = vector.broadcast %9 : vector<16x1xf32> to vector<16x128xf32>
    %11 = arith.mulf %1, %10 : vector<16x128xf32>
    %12 = arith.truncf %11 : vector<16x128xf32> to vector<16x128xbf16>
    %c0_3 = arith.constant 0 : index
    %c0_4 = arith.constant 0 : index
    %13 = vector.load %arg2[%c0_3, %c0_4] : memref<1x128xbf16, #tpu.memory_space<vmem>>, vector<1x128xbf16>
    %14 = vector.broadcast %13 : vector<1x128xbf16> to vector<16x128xbf16>
    %15 = arith.mulf %14, %12 : vector<16x128xbf16>
    %c0_5 = arith.constant 0 : index
    %c0_6 = arith.constant 0 : index
    %16 = vector.load %arg3[%c0_5, %c0_6] : memref<16x128xbf16, #tpu.memory_space<vmem>>, vector<16x128xbf16>
    tpu.vector_store %arg3[%c0_5, %c0_6], %15 {strides = array<i32>} : memref<16x128xbf16, #tpu.memory_space<vmem>>, vector<16x128xbf16>,
    return
  }
  func.func @transform_0(%arg0: i32) -> (i32, i32) {
    %c0_i32 = arith.constant 0 : i32
    %c0_i32_0 = arith.constant 0 : i32
    return %arg0, %c0_i32 : i32, i32
  }
  func.func @transform_1(%arg0: i32) -> (i32, i32) {
    %c0_i32 = arith.constant 0 : i32
    %c0_i32_0 = arith.constant 0 : i32
    %c0_i32_1 = arith.constant 0 : i32
    return %c0_i32, %c0_i32_0 : i32, i32
  }
  func.func @transform_2(%arg0: i32) -> (i32, i32) {
    %c0_i32 = arith.constant 0 : i32
    %c0_i32_0 = arith.constant 0 : i32
    return %arg0, %c0_i32 : i32, i32
  }
}

</mosaic_0001>

<llo_original>
// kernel: tpu_custom_call.1
$region0: #{tpu_custom_call.1}
  #allocation0 [shape = 'u32[]', space=smem, size = 0x4, offset = 0x4, fixed_abs, tag = 'smem constant byte address 0x4 - core index']
  #allocation1 [shape = 'u32[144,128]{1,0:T(1,128)}', space=vmem, size = 0x12000, scoped, tag = 'internal scratch']
  %s0 = inlined_call_operand.hbm [shape: bf16[16,128], index: 0, kind: input, shape index: {}]
  %s1 = inlined_call_operand.vmem [shape: bf16[1,128], index: 1, kind: input, shape index: {}]
  %s2 = inlined_call_operand.hbm [shape: bf16[16,128], index: 2, kind: output, shape index: {}]
  %s3 = sld [smem:[#allocation0]]
  $region22: #{tpu_custom_call.1} parent=0
    _
  %s5 = ssub.s32 1, %s3
  %s6 = scalar_select 0, %s5, %s3
  $region1: #{tpu_custom_call.1} parent=0
    #allocation2 [shape = 'u8[4096]{0}', space=vmem, size = 0x1000, scoped, tag = 'input window, operand 0, single buffered']
    #allocation3 [shape = 's32[1]{0}', space=sflag, size = 0x4, scoped, tag = 'scoped memory for tpu_custom_call.1']
    #allocation4 [shape = 's32[1]{0}', space=sflag, size = 0x4, scoped, tag = 'scoped memory for tpu_custom_call.1']
    #allocation5 [shape = 'u8[4096]{0}', space=vmem, size = 0x1000, scoped, tag = 'output window, operand 0, single buffered']
    %7 = vsyncpa [#allocation3], 0
    %8 = vsyncpa [#allocation4], 0
    // Predicated region
    $region2: #{tpu_custom_call.1} parent=1 // pred_check
      _
    $region3: #{tpu_custom_call.1} parent=1 // pred_check_branch
      %10 = sbr.rel (0) target = $region5
    $region4: #{tpu_custom_call.1} parent=1 // pred_region
      %s12 = ssub.s32 128, 128
      %13 = vsyncadd [#allocation3], %s12
      %s14 = sshll.u32 [#allocation2], 4
      %s15 = int_to_ptr.vmem [resolvable:$true] %s14
      %20 = dma.hbm_to_vmem [thread:$0]  %s0, 128, %s15, [#allocation3], 64, 64, 4
    $region5: #{tpu_custom_call.1} parent=1 // pred_fallthru
      _
    // Predicated region
    $region6: #{tpu_custom_call.1} parent=1 // pred_check
      _
    $region7: #{tpu_custom_call.1} parent=1 // pred_check_branch
      %22 = sbr.rel (0) target = $region9
    $region8: #{tpu_custom_call.1} parent=1 // pred_region
      _
    $region9: #{tpu_custom_call.1} parent=1 // pred_fallthru
      _
    // Predicated region
    $region10: #{tpu_custom_call.1} parent=1 // pred_check
      _
    $region11: #{tpu_custom_call.1} parent=1 // pred_check_branch
      %24 = sbr.rel (0) target = $region13
    $region12: #{tpu_custom_call.1} parent=1 // pred_region
      %25 = dma.done [#allocation3], 128
    $region13: #{tpu_custom_call.1} parent=1 // pred_fallthru
      _
    %v26 = vld [vmem:[#allocation2] sm:$0xf]
    %v27 = vld [vmem:[#allocation2 + $0x4] sm:$0xf]
    %v28 = vunpack.c.l.bf16 %v26
    %v29 = vunpack.c.l.bf16 %v27
    %v30 = vmul.f32 %v28, %v28
    %v31 = vmul.f32 %v29, %v29
    %32 = vadd.xlane.f32.xlu0 %v30
    %v33 = vpop.xlane.xlu0 %32
    %34 = vadd.xlane.f32.xlu0 %v31
    %v35 = vpop.xlane.xlu0 %34
    %v36 = vrcp.pop 128.0
    %v37 = vmul.f32 %v33, %v36
    %v38 = vmul.f32 %v35, %v36
    %v39 = vadd.f32 %v37, 1e-06
    %v40 = vadd.f32 %v38, 1e-06
    %v41 = vrsqrt.pop %v39
    %v42 = vrsqrt.pop %v40
    %v43 = vmul.f32 %v28, %v41
    %v44 = vmul.f32 %v29, %v42
    %v45 = vpack.c.bf16 %v44, %v43
    %v46 = vld [vmem:[%s1] sm:$0x1]
    %v48 = vpack.i.b16 %v46, %v46
    %v50 = vlaneseq
    %v51 = vshrl.u32 %v50, 7
    %v52 = vsub.s32 0, %v51
    %v53 = vrot.slane %v48, %v52
    %v54 = vmul.bf16 %v53, %v45
    %v56 = vunpack.c.l.b16 %v54
    %v57 = vunpack.c.h.b16 %v54
    %v58 = vpack.c.b16 %v56, %v56
    %v59 = vpack.c.b16 %v57, %v57
    %62 = vst [vmem:[#allocation5] sm:$0xf] %v58
    %63 = vst [vmem:[#allocation5 + $0x4] sm:$0xf] %v59
    // Predicated region
    $region14: #{tpu_custom_call.1} parent=1 // pred_check
      _
    $region15: #{tpu_custom_call.1} parent=1 // pred_check_branch
      %65 = sbr.rel (0) target = $region17
    $region16: #{tpu_custom_call.1} parent=1 // pred_region
      %s67 = ssub.s32 128, 128
      %68 = vsyncadd [#allocation4], %s67
      %s69 = sshll.u32 [#allocation5], 4
      %s70 = int_to_ptr.vmem [resolvable:$true] %s69
      %75 = dma.vmem_to_hbm [thread:$0]  %s70, 128, %s2, [#allocation4], 64, 64, 4
    $region17: #{tpu_custom_call.1} parent=1 // pred_fallthru
      _
    // Predicated region
    $region18: #{tpu_custom_call.1} parent=1 // pred_check
      _
    $region19: #{tpu_custom_call.1} parent=1 // pred_check_branch
      %77 = sbr.rel (0) target = $region21
    $region20: #{tpu_custom_call.1} parent=1 // pred_region
      %78 = dma.done [#allocation4], 128
    $region21: #{tpu_custom_call.1} parent=1 // pred_fallthru
      _
    %79 = vsyncpa [#allocation3], 1
    %80 = vsyncpa [#allocation4], 1

</llo_original>
